<compile_context>
chip_gen: v7x
topology: tpu7x:2x2x1
jax: 0.10.0
libtpu: 0.0.40
codegen_flags: <defaults>
</compile_context>

<pallas_src>
import functools
import math

import jax
import jax.numpy as jnp
from jax.experimental import pallas as pl
from jax.experimental.pallas import tpu as pltpu

_MASK31 = 0x7FFFFFFF   # keep hash state in [0, 2^31) so >> behaves like a logical shift
_HASH_M1 = 0x45D9F3B   # lowbias32-style multipliers (fit in int32)
_HASH_M2 = 0x2C1B3C6D
_SEED_M = 0x3C6EF35F   # odd constant to spread the seed across the counter space


def _mix31(x):
    """Cheap 2-round integer hash -> well-mixed non-negative 31-bit int32 values."""
    x = x & _MASK31
    x = x ^ (x >> 15)
    x = (x * _HASH_M1) & _MASK31
    x = x ^ (x >> 13)
    x = (x * _HASH_M2) & _MASK31
    return x


def _sdpa_dropout_kernel(seed_ref, q_ref, k_ref, v_ref, o_ref, *,
                         inv_scale, keep_prob, mxu_dtype):
    blk = pl.program_id(0)

    # Fold 1/sqrt(D) into Q in f32 (portable to v5e's f32-only VPU), then cast the
    # MXU operands to bf16: bf16 operands + f32 accumulation is the native MXU path.
    q = (q_ref[...].astype(jnp.float32) * inv_scale).astype(mxu_dtype)   # (Bt, Lq, D)
    k = k_ref[...].astype(mxu_dtype)                                     # (Bt, Lk, D)

    # scores[b, i, j] = sum_d q[b, i, d] * k[b, j, d]  -- contract D directly,
    # no explicit transpose of K (no XLU shuffle).
    scores = jnp.einsum("bqd,bkd->bqk", q, k,
                        preferred_element_type=jnp.float32)              # (Bt, Lq, Lk) f32

    # Numerically stable softmax along the key axis, f32 math.
    m = jnp.max(scores, axis=-1, keepdims=True)
    e = jnp.exp(scores - m)
    denom = jnp.sum(e, axis=-1, keepdims=True)
    # EUP approx reciprocal instead of a VPU divide (flash-attention finalize trick).
    recip = pl.reciprocal(denom, approx=True)

    if keep_prob >= 1.0:
        # No dropout.
        p = e * recip
    else:
        # Counter-based hash dropout mask with an integer threshold compare:
        # no int->float conversion, no float compare over the scores tile.
        Bt, Lq, Lk = scores.shape
        shape = (Bt, Lq, Lk)
        base = blk * (Bt * Lq * Lk) + seed_ref[0] * _SEED_M              # scalar (SMEM)
        ctr = (base
               + jax.lax.broadcasted_iota(jnp.int32, shape, 0) * (Lq * Lk)
               + jax.lax.broadcasted_iota(jnp.int32, shape, 1) * Lk
               + jax.lax.broadcasted_iota(jnp.int32, shape, 2))          # globally unique
        bits = _mix31(ctr)                                               # uniform in [0, 2^31)
        thresh = jnp.int32(min(int(keep_prob * 2147483648.0), _MASK31))
        # Fold the 1/keep_prob rescale into the softmax normalization.
        inv = jnp.float32(1.0 / keep_prob) * recip
        p = jnp.where(bits < thresh, e * inv, 0.0)

    v = v_ref[...].astype(mxu_dtype)                                     # (Bt, Lk, Dv)
    out = jnp.einsum("bqk,bkd->bqd", p.astype(mxu_dtype), v,
                     preferred_element_type=jnp.float32)                 # (Bt, Lq, Dv) f32
    o_ref[...] = out.astype(o_ref.dtype)


def sdpa_dropout(query, key, value, seed, dropout_p=0.5, block_b=None,
                 mxu_dtype=jnp.bfloat16):
    """query: (B, Lq, D), key: (B, Lk, D), value: (B, Lk, Dv) -> (B, Lq, Dv)."""
    B, Lq, D = query.shape
    Bk, Lk, Dk = key.shape
    Bv, Lv, Dv = value.shape
    assert Bk == B and Bv == B and Dk == D and Lv == Lk

    out_dtype = query.dtype
    keep_prob = 1.0 - float(dropout_p)
    if keep_prob <= 0.0:
        # dropout(p=1.0): everything dropped -> pure zero-fill, no kernel, no HBM reads.
        return jnp.zeros((B, Lq, Dv), out_dtype)

    # ---- VMEM-budgeted batch packing -------------------------------------------
    # Rough per-batch VMEM footprint: f32 I/O tiles (double-buffered by BlockSpec),
    # f32 scores/exp/hash intermediates and bf16 operand copies.
    per_batch = 4 * (3 * (Lq * D + Lk * D + Lk * Dv + Lq * Dv) + 8 * Lq * Lk)
    vmem_budget = 8 * 2 ** 20          # conservative: fits v5e's 16 MiB scoped default
    max_by_vmem = max(1, vmem_budget // per_batch)
    # Keep >= 2 grid steps so the "parallel" batch axis can be split across the two
    # v7x TensorCores (harmless on single-TC v5e/v6e).
    cap = max(1, min(max_by_vmem, B // 2 if B >= 2 else 1))
    if block_b is None:
        block_b = 1
        for cand in range(min(B, cap), 0, -1):
            if B % cand == 0:
                block_b = cand
                break
    assert B % block_b == 0
    grid = (B // block_b,)

    step_bytes = block_b * per_batch
    vmem_limit = int(min(64 * 2 ** 20, max(3 * step_bytes, 16 * 2 ** 20)))

    inv_scale = 1.0 / math.sqrt(float(D))
    kernel = functools.partial(_sdpa_dropout_kernel, inv_scale=inv_scale,
                               keep_prob=keep_prob, mxu_dtype=mxu_dtype)

    cost = pl.CostEstimate(
        flops=2 * B * Lq * Lk * (D + Dv),
        transcendentals=B * Lq * Lk,
        bytes_accessed=4 * B * (Lq * D + Lk * D + Lk * Dv + Lq * Dv),
    )

    return pl.pallas_call(
        kernel,
        out_shape=jax.ShapeDtypeStruct((B, Lq, Dv), out_dtype),
        grid_spec=pltpu.PrefetchScalarGridSpec(
            num_scalar_prefetch=1,            # seed lands in SMEM
            grid=grid,
            in_specs=[
                pl.BlockSpec((block_b, Lq, D), lambda b, seed: (b, 0, 0)),
                pl.BlockSpec((block_b, Lk, D), lambda b, seed: (b, 0, 0)),
                pl.BlockSpec((block_b, Lk, Dv), lambda b, seed: (b, 0, 0)),
            ],
            out_specs=pl.BlockSpec((block_b, Lq, Dv), lambda b, seed: (b, 0, 0)),
        ),
        compiler_params=pltpu.CompilerParams(
            # Per-element counter-based RNG -> grid steps are fully independent,
            # so the batch axis can be sharded across TensorCores (v7x megacore).
            dimension_semantics=("parallel",),
            vmem_limit_bytes=vmem_limit),
        cost_estimate=cost,
    )(seed, query, key, value)


if __name__ == "__main__":
    # Small shapes consistent with the module's (B, Lq, D)x(B, Lk, D)x(B, Lk, Dv) attention.
    B, Lq, Lk, D, Dv = 8, 8, 16, 32, 32

    k0 = jax.random.PRNGKey(0)
    kq, kk, kv = jax.random.split(k0, 3)
    query = jax.random.normal(kq, (B, Lq, D), dtype=jnp.float32)
    key = jax.random.normal(kk, (B, Lk, D), dtype=jnp.float32)
    value = jax.random.normal(kv, (B, Lk, Dv), dtype=jnp.float32)
    seed = jnp.array([42], dtype=jnp.int32)

    # Deterministic path (dropout disabled) checked against a pure-JAX f32 reference
    # (kernel runs bf16 MXU operands with f32 accumulation -> small bf16 rounding).
    out_nodrop = sdpa_dropout(query, key, value, seed, dropout_p=0.0)
    jax.block_until_ready(out_nodrop)
    ref_scores = jnp.einsum("bqd,bkd->bqk", query, key) * (1.0 / math.sqrt(D))
    ref = jnp.einsum("bqk,bkd->bqd", jax.nn.softmax(ref_scores, axis=-1), value)
    assert bool(jnp.allclose(out_nodrop, ref, atol=5e-2, rtol=5e-2)), (
        "max abs err = %f" % float(jnp.max(jnp.abs(out_nodrop - ref))))

    # Dropout path (p=0.5), matching the PyTorch module's default.
    out = sdpa_dropout(query, key, value, seed, dropout_p=0.5)
    jax.block_until_ready(out)
    assert out.shape == (B, Lq, Dv)
    assert bool(jnp.all(jnp.isfinite(out)))

    # Degenerate p=1.0 path handled in the wrapper (zero-fill, no kernel launch).
    out_all_drop = sdpa_dropout(query, key, value, seed, dropout_p=1.0)
    jax.block_until_ready(out_all_drop)
    assert bool(jnp.all(out_all_drop == 0.0))

    print("KERNEL_OK")
</pallas_src>

<mosaic_0001>
module attributes {stable_mosaic.version = 11 : i64} {
  func.func @_sdpa_dropout_kernel(%arg0: i32, %arg1: memref<1xi32, #tpu.memory_space<smem>>, %arg2: memref<4x8x32xf32, #tpu.memory_space<vmem>>, %arg3: memref<4x16x32xf32, #tpu.memory_space<vmem>>, %arg4: memref<4x16x32xf32, #tpu.memory_space<vmem>>, %arg5: memref<4x8x32xf32, #tpu.memory_space<vmem>>) attributes {dimension_semantics = [#tpu.dimension_semantics<parallel>], iteration_bounds = array<i64: 2>, scalar_prefetch = 1 : i64, scratch_operands = 0 : i64, tpu.core_type = #tpu.core_type<tc>, window_params = [{transform_indices = @transform_0, window_bounds = array<i64: 4, 8, 32>}, {transform_indices = @transform_1, window_bounds = array<i64: 4, 16, 32>}, {transform_indices = @transform_2, window_bounds = array<i64: 4, 16, 32>}, {transform_indices = @transform_3, window_bounds = array<i64: 4, 8, 32>}]} {
    %c0 = arith.constant 0 : index
    %c0_0 = arith.constant 0 : index
    %c0_1 = arith.constant 0 : index
    %0 = vector.load %arg2[%c0, %c0_0, %c0_1] : memref<4x8x32xf32, #tpu.memory_space<vmem>>, vector<4x8x32xf32>
    %cst = arith.constant 0.176776692 : f32
    %1 = vector.broadcast %cst : f32 to vector<4x8x32xf32>
    %2 = arith.mulf %0, %1 : vector<4x8x32xf32>
    %3 = arith.truncf %2 : vector<4x8x32xf32> to vector<4x8x32xbf16>
    %c0_2 = arith.constant 0 : index
    %c0_3 = arith.constant 0 : index
    %c0_4 = arith.constant 0 : index
    %4 = vector.load %arg3[%c0_2, %c0_3, %c0_4] : memref<4x16x32xf32, #tpu.memory_space<vmem>>, vector<4x16x32xf32>
    %5 = arith.truncf %4 : vector<4x16x32xf32> to vector<4x16x32xbf16>
    "tpu.trace_start"() <{level = 10 : i32, message = "bqd,bkd->bqk"}> : () -> ()
    %cst_5 = arith.constant dense<0.000000e+00> : vector<4x8x16xf32>
    %6 = tpu.matmul %3, %5, %cst_5 {dimension_numbers = #tpu.dot_dimension_numbers<[2], [2], [1], [1], [0, 0, 0, 1, 1, 1], [0], [0]>} : vector<4x8x32xbf16>, vector<4x16x32xbf16>, vector<4x8x16xf32> -> vector<4x8x16xf32>
    "tpu.trace_stop"() : () -> ()
    %cst_6 = arith.constant dense<0xFF800000> : vector<4x8xf32>
    %7 = vector.multi_reduction <maximumf>, %6, %cst_6 [2] : vector<4x8x16xf32> to vector<4x8xf32>
    %8 = vector.shape_cast %7 : vector<4x8xf32> to vector<4x8x1xf32>
    %9 = vector.broadcast %8 : vector<4x8x1xf32> to vector<4x8x16xf32>
    %10 = arith.subf %6, %9 : vector<4x8x16xf32>
    %11 = math.exp %10 : vector<4x8x16xf32>
    %cst_7 = arith.constant dense<0.000000e+00> : vector<4x8xf32>
    %12 = vector.multi_reduction <add>, %11, %cst_7 [2] : vector<4x8x16xf32> to vector<4x8xf32>
    %13 = vector.shape_cast %12 : vector<4x8xf32> to vector<4x8x1xf32>
    %14 = tpu.reciprocal %13 {approx = true} : vector<4x8x1xf32> -> vector<4x8x1xf32>
    %15 = vector.broadcast %14 : vector<4x8x1xf32> to vector<4x8x16xf32>
    %16 = arith.mulf %11, %15 : vector<4x8x16xf32>
    %c0_8 = arith.constant 0 : index
    %c0_9 = arith.constant 0 : index
    %c0_10 = arith.constant 0 : index
    %17 = vector.load %arg4[%c0_8, %c0_9, %c0_10] : memref<4x16x32xf32, #tpu.memory_space<vmem>>, vector<4x16x32xf32>
    %18 = arith.truncf %17 : vector<4x16x32xf32> to vector<4x16x32xbf16>
    %19 = arith.truncf %16 : vector<4x8x16xf32> to vector<4x8x16xbf16>
    "tpu.trace_start"() <{level = 10 : i32, message = "bqk,bkd->bqd"}> : () -> ()
    %cst_11 = arith.constant dense<0.000000e+00> : vector<4x8x32xf32>
    %20 = tpu.matmul %19, %18, %cst_11 {dimension_numbers = #tpu.dot_dimension_numbers<[2], [1], [1], [2], [0, 0, 0, 1, 1, 2], [0], [0]>} : vector<4x8x16xbf16>, vector<4x16x32xbf16>, vector<4x8x32xf32> -> vector<4x8x32xf32>
    "tpu.trace_stop"() : () -> ()
    %c0_12 = arith.constant 0 : index
    %c0_13 = arith.constant 0 : index
    %c0_14 = arith.constant 0 : index
    %21 = vector.load %arg5[%c0_12, %c0_13, %c0_14] : memref<4x8x32xf32, #tpu.memory_space<vmem>>, vector<4x8x32xf32>
    tpu.vector_store %arg5[%c0_12, %c0_13, %c0_14], %20 {strides = array<i32>} : memref<4x8x32xf32, #tpu.memory_space<vmem>>, vector<4x8x32xf32>,
    return
  }
  func.func @transform_0(%arg0: i32, %arg1: memref<1xi32, #tpu.memory_space<smem>>) -> (i32, i32, i32) {
    %c0_i32 = arith.constant 0 : i32
    %c0_i32_0 = arith.constant 0 : i32
    %c0_i32_1 = arith.constant 0 : i32
    return %arg0, %c0_i32, %c0_i32_0 : i32, i32, i32
  }
  func.func @transform_1(%arg0: i32, %arg1: memref<1xi32, #tpu.memory_space<smem>>) -> (i32, i32, i32) {
    %c0_i32 = arith.constant 0 : i32
    %c0_i32_0 = arith.constant 0 : i32
    %c0_i32_1 = arith.constant 0 : i32
    return %arg0, %c0_i32, %c0_i32_0 : i32, i32, i32
  }
  func.func @transform_2(%arg0: i32, %arg1: memref<1xi32, #tpu.memory_space<smem>>) -> (i32, i32, i32) {
    %c0_i32 = arith.constant 0 : i32
    %c0_i32_0 = arith.constant 0 : i32
    %c0_i32_1 = arith.constant 0 : i32
    return %arg0, %c0_i32, %c0_i32_0 : i32, i32, i32
  }
  func.func @transform_3(%arg0: i32, %arg1: memref<1xi32, #tpu.memory_space<smem>>) -> (i32, i32, i32) {
    %c0_i32 = arith.constant 0 : i32
    %c0_i32_0 = arith.constant 0 : i32
    %c0_i32_1 = arith.constant 0 : i32
    return %arg0, %c0_i32, %c0_i32_0 : i32, i32, i32
  }
}

</mosaic_0001>

<llo_original>
// kernel: tpu_custom_call.1
$region0: #{tpu_custom_call.1}
  #allocation0 [shape = 'u32[]', space=smem, size = 0x4, offset = 0x4, fixed_abs, tag = 'smem constant byte address 0x4 - core index']
  #allocation1 [shape = 'u32[144,128]{1,0:T(1,128)}', space=vmem, size = 0x12000, scoped, tag = 'internal scratch']
  #allocation2 [shape = 's32[1]{0}', space=sflag, size = 0x4, scoped, tag = 'scoped memory for tpu_custom_call.1']
  #allocation3 [shape = 's32[1]{0:T(128)S(6)}', space=smem, size = 0x200, scoped, tag = 'prefetched SMEM operand 0']
  %s0 = inlined_call_operand.<no memory space> [shape: s32[1], index: 0, kind: input, shape index: {}]
  %s1 = inlined_call_operand.hbm [shape: f32[8,8,32], index: 1, kind: input, shape index: {}]
  %s2 = inlined_call_operand.hbm [shape: f32[8,16,32], index: 2, kind: input, shape index: {}]
  %s3 = inlined_call_operand.hbm [shape: f32[8,16,32], index: 3, kind: input, shape index: {}]
  %s4 = inlined_call_operand.hbm [shape: f32[8,8,32], index: 4, kind: output, shape index: {}]
  %s5 = sld [smem:[#allocation0]]
  $region57: #{tpu_custom_call.1} parent=0
    _
  %s7 = ssub.s32 1, %s5
  %s8 = scalar_select 0, %s7, %s5
  %9 = sst [smem:[#allocation3]] %s0
  $region1: #{tpu_custom_call.1} parent=0
    #allocation4 [shape = 'u8[32768]{0}', space=vmem, size = 0x8000, scoped, tag = 'input window, operand 1']
    #allocation5 [shape = 's32[2]{0}', space=sflag, size = 0x8, scoped, tag = 'scoped memory for tpu_custom_call.1']
    #allocation6 [shape = 's32[2]{0}', space=sflag, size = 0x8, scoped, tag = 'scoped memory for tpu_custom_call.1']
    #allocation7 [shape = 'u8[65536]{0}', space=vmem, size = 0x10000, scoped, tag = 'input window, operand 2']
    #allocation8 [shape = 's32[2]{0}', space=sflag, size = 0x8, scoped, tag = 'scoped memory for tpu_custom_call.1']
    #allocation9 [shape = 'u8[65536]{0}', space=vmem, size = 0x10000, scoped, tag = 'input window, operand 3']
    #allocation10 [shape = 'u8[32768]{0}', space=vmem, size = 0x8000, scoped, tag = 'output window, operand 0']
    %10 = vsyncpa [#allocation5], 0
    %s11 = scalar_lea.sflag [#allocation5], 1
    %12 = vsyncpa %s11, 0
    %13 = vsyncpa [#allocation8], 0
    %s14 = scalar_lea.sflag [#allocation8], 1
    %15 = vsyncpa %s14, 0
    %16 = vsyncpa [#allocation6], 0
    %s17 = scalar_lea.sflag [#allocation6], 1
    %18 = vsyncpa %s17, 0
    loop: start=0, step=1, limit=4
    $region2: #{tpu_custom_call.1} parent=1 // loop_pre_header
      _
    $region3: #{tpu_custom_call.1} parent=1 // loop_header
      %s20 = sphi 0, %s24
      %p21 = scmp.ge.s32.totalorder %s20, 4
      %s30 = sphi 0, %s32
      %s33 = sphi 0, %s30
      %s34 = sphi 0, %s33
      %s50 = sphi 0, %s34
      %s56 = sphi 0, %s58
      %s59 = sphi 0, %s56
      %s60 = sphi 0, %s59
      %s76 = sphi 0, %s60
      %s82 = sphi 0, %s84
      %s85 = sphi 0, %s82
      %s86 = sphi 0, %s85
      %s102 = sphi 0, %s86
      %s108 = sphi 0, %s110
      %s111 = sphi 0, %s108
      %s112 = sphi 0, %s111
      %s128 = sphi 0, %s112
    $region4: #{tpu_custom_call.1} parent=1 // loop_header_branch
      %23 = sbr.rel (%p21) target = $region8
    $region5: #{tpu_custom_call.1} parent=1 // loop_body
      %s25 = ssub.s32 %s20, 1
      %s26 = ssub.s32 %s20, 2
      %s27 = sadd.s32 %s20, 1
      %s28 = ssub.s32 %s20, %s27
      %p29 = scmp.eq.s32.totalorder %s28, 0
      %s31 = sadd.s32 %s30, 1
      %s32 = scalar_select %p29, %s30, %s31
      %p35 = pneg %p29
      %p36 = scmp.eq.s32.totalorder %s20, 1
      %p37 = por %p35, %p36
      %p38 = scmp.ne.s32.totalorder %s30, %s33
      %p39 = scmp.eq.s32.totalorder %s20, 0
      %p40 = por %p38, %p39
      %p41 = scmp.ne.s32.totalorder %s30, %s33
      %p42 = scmp.eq.s32.totalorder %s25, 1
      %p43 = por %p41, %p42
      %p44 = scmp.ne.s32.totalorder %s33, %s34
      %p45 = scmp.eq.s32.totalorder %s25, 0
      %p46 = por %p44, %p45
      %p47 = scmp.ne.s32.totalorder %s33, %s34
      %p48 = scmp.eq.s32.totalorder %s26, 1
      %p49 = por %p47, %p48
      %p51 = scmp.ne.s32.totalorder %s34, %s50
      %p52 = scmp.eq.s32.totalorder %s26, 0
      %p53 = por %p51, %p52
      %s54 = ssub.s32 %s20, %s27
      %p55 = scmp.eq.s32.totalorder %s54, 0
      %s57 = sadd.s32 %s56, 1
      %s58 = scalar_select %p55, %s56, %s57
      %p61 = pneg %p55
      %p62 = scmp.eq.s32.totalorder %s20, 1
      %p63 = por %p61, %p62
      %p64 = scmp.ne.s32.totalorder %s56, %s59
      %p65 = scmp.eq.s32.totalorder %s20, 0
      %p66 = por %p64, %p65
      %p67 = scmp.ne.s32.totalorder %s56, %s59
      %p68 = scmp.eq.s32.totalorder %s25, 1
      %p69 = por %p67, %p68
      %p70 = scmp.ne.s32.totalorder %s59, %s60
      %p71 = scmp.eq.s32.totalorder %s25, 0
      %p72 = por %p70, %p71
      %p73 = scmp.ne.s32.totalorder %s59, %s60
      %p74 = scmp.eq.s32.totalorder %s26, 1
      %p75 = por %p73, %p74
      %p77 = scmp.ne.s32.totalorder %s60, %s76
      %p78 = scmp.eq.s32.totalorder %s26, 0
      %p79 = por %p77, %p78
      %s80 = ssub.s32 %s20, %s27
      %p81 = scmp.eq.s32.totalorder %s80, 0
      %s83 = sadd.s32 %s82, 1
      %s84 = scalar_select %p81, %s82, %s83
      %p87 = pneg %p81
      %p88 = scmp.eq.s32.totalorder %s20, 1
      %p89 = por %p87, %p88
      %p90 = scmp.ne.s32.totalorder %s82, %s85
      %p91 = scmp.eq.s32.totalorder %s20, 0
      %p92 = por %p90, %p91
      %p93 = scmp.ne.s32.totalorder %s82, %s85
      %p94 = scmp.eq.s32.totalorder %s25, 1
      %p95 = por %p93, %p94
      %p96 = scmp.ne.s32.totalorder %s85, %s86
      %p97 = scmp.eq.s32.totalorder %s25, 0
      %p98 = por %p96, %p97
      %p99 = scmp.ne.s32.totalorder %s85, %s86
      %p100 = scmp.eq.s32.totalorder %s26, 1
      %p101 = por %p99, %p100
      %p103 = scmp.ne.s32.totalorder %s86, %s102
      %p104 = scmp.eq.s32.totalorder %s26, 0
      %p105 = por %p103, %p104
      %s106 = ssub.s32 %s20, %s27
      %p107 = scmp.eq.s32.totalorder %s106, 0
      %s109 = sadd.s32 %s108, 1
      %s110 = scalar_select %p107, %s108, %s109
      %p113 = pneg %p107
      %p114 = scmp.eq.s32.totalorder %s20, 1
      %p115 = por %p113, %p114
      %p116 = scmp.ne.s32.totalorder %s108, %s111
      %p117 = scmp.eq.s32.totalorder %s20, 0
      %p118 = por %p116, %p117
      %p119 = scmp.ne.s32.totalorder %s108, %s111
      %p120 = scmp.eq.s32.totalorder %s25, 1
      %p121 = por %p119, %p120
      %p122 = scmp.ne.s32.totalorder %s111, %s112
      %p123 = scmp.eq.s32.totalorder %s25, 0
      %p124 = por %p122, %p123
      %p125 = scmp.ne.s32.totalorder %s111, %s112
      %p126 = scmp.eq.s32.totalorder %s26, 1
      %p127 = por %p125, %p126
      %p129 = scmp.ne.s32.totalorder %s112, %s128
      %p130 = scmp.eq.s32.totalorder %s26, 0
      %p131 = por %p129, %p130
      %p132 = scmp.le.s32.totalorder 1, %s20
      %p133 = scmp.lt.s32.totalorder %s20, 3
      %p134 = pnand %p132, %p133
      %p135 = pneg %p134
      // Predicated region
      $region9: #{tpu_custom_call.1} parent=5 // pred_check
        _
      $region10: #{tpu_custom_call.1} parent=5 // pred_check_branch
        %137 = sbr.rel (%p134) target = $region12
      $region11: #{tpu_custom_call.1} parent=5 // pred_region
        %s138 = ssub.s32 %s20, 1
      $region12: #{tpu_custom_call.1} parent=5 // pred_fallthru
        _
      %p139 = scmp.lt.s32.totalorder %s20, 2
      // Predicated region
      $region13: #{tpu_custom_call.1} parent=5 // pred_check
        %p140 = pneg %p139
      $region14: #{tpu_custom_call.1} parent=5 // pred_check_branch
        %142 = sbr.rel (%p140) target = $region16
      $region15: #{tpu_custom_call.1} parent=5 // pred_region
        // Predicated region
        $region17: #{tpu_custom_call.1} parent=15 // pred_check
          %p143 = pneg %p40
        $region18: #{tpu_custom_call.1} parent=15 // pred_check_branch
          %145 = sbr.rel (%p143) target = $region20
        $region19: #{tpu_custom_call.1} parent=15 // pred_region
          %s146 = sand.u32 %s30, 1
          %s147 = scalar_lea.sflag [#allocation5], %s146
          %s148 = sand.u32 %s30, 1
          %s149 = smul.addr %s148, 32
          %s150 = scalar_lea.vmem [#allocation4], %s149
          %s151 = smul.u32 4, %s20
          %s153 = ssub.s32 512, 512
          %154 = vsyncadd %s147, %s153
          %s155 = smul.addr %s151, 128
          %s156 = scalar_lea.hbm %s1, %s155
          %s157 = sshll.u32 %s150, 4
          %s158 = int_to_ptr.vmem [resolvable:$true] %s157
          %163 = dma.hbm_to_vmem [thread:$0]  %s156, 512, %s158, %s147, 128, 128, 8
        $region20: #{tpu_custom_call.1} parent=15 // pred_fallthru
          _
        // Predicated region
        $region21: #{tpu_custom_call.1} parent=15 // pred_check
          %p164 = pneg %p66
        $region22: #{tpu_custom_call.1} parent=15 // pred_check_branch
          %166 = sbr.rel (%p164) target = $region24
        $region23: #{tpu_custom_call.1} parent=15 // pred_region
          %s167 = sand.u32 %s20, 1
          %s168 = scalar_lea.sflag [#allocation8], %s167
          %s169 = sand.u32 %s56, 1
          %s170 = smul.addr %s169, 64
          %s171 = scalar_lea.vmem [#allocation7], %s170
          %s172 = smul.u32 4, %s20
          %s174 = ssub.s32 1024, 1024
          %175 = vsyncadd %s168, %s174
          %s176 = smul.addr %s172, 2
          %s177 = smul.addr %s176, 128
          %s178 = scalar_lea.hbm %s2, %s177
          %s179 = sshll.u32 %s171, 4
          %s180 = int_to_ptr.vmem [resolvable:$true] %s179
          %185 = dma.hbm_to_vmem [thread:$0]  %s178, 1024, %s180, %s168, 128, 128, 8
        $region24: #{tpu_custom_call.1} parent=15 // pred_fallthru
          _
        // Predicated region
        $region25: #{tpu_custom_call.1} parent=15 // pred_check
          %p186 = pneg %p92
        $region26: #{tpu_custom_call.1} parent=15 // pred_check_branch
          %188 = sbr.rel (%p186) target = $region28
        $region27: #{tpu_custom_call.1} parent=15 // pred_region
          %s189 = sand.u32 %s20, 1
          %s190 = scalar_lea.sflag [#allocation8], %s189
          %s191 = sand.u32 %s82, 1
          %s192 = smul.addr %s191, 64
          %s193 = scalar_lea.vmem [#allocation9], %s192
          %s194 = smul.u32 4, %s20
          %s196 = ssub.s32 1024, 1024
          %197 = vsyncadd %s190, %s196
          %s198 = smul.addr %s194, 2
          %s199 = smul.addr %s198, 128
          %s200 = scalar_lea.hbm %s3, %s199
          %s201 = sshll.u32 %s193, 4
          %s202 = int_to_ptr.vmem [resolvable:$true] %s201
          %207 = dma.hbm_to_vmem [thread:$0]  %s200, 1024, %s202, %s190, 128, 128, 8
        $region28: #{tpu_custom_call.1} parent=15 // pred_fallthru
          _
      $region16: #{tpu_custom_call.1} parent=5 // pred_fallthru
        _
      %p208 = scmp.le.s32.totalorder 1, %s20
      %p209 = scmp.lt.s32.totalorder %s20, 3
      %p210 = pnand %p208, %p209
      %p211 = pneg %p210
      // Predicated region
      $region29: #{tpu_custom_call.1} parent=5 // pred_check
        _
      $region30: #{tpu_custom_call.1} parent=5 // pred_check_branch
        %213 = sbr.rel (%p210) target = $region32
      $region31: #{tpu_custom_call.1} parent=5 // pred_region
        %s214 = ssub.s32 %s20, 1
        %s215 = sand.u32 %s33, 1
        %s216 = scalar_lea.sflag [#allocation5], %s215
        %s217 = sand.u32 %s33, 1
        %s218 = smul.addr %s217, 32
        %s219 = scalar_lea.vmem [#allocation4], %s218
        // Predicated region
        $region33: #{tpu_custom_call.1} parent=31 // pred_check
          %p220 = pneg %p46
        $region34: #{tpu_custom_call.1} parent=31 // pred_check_branch
          %222 = sbr.rel (%p220) target = $region36
        $region35: #{tpu_custom_call.1} parent=31 // pred_region
          %223 = dma.done %s216, 512
        $region36: #{tpu_custom_call.1} parent=31 // pred_fallthru
          _
        %s224 = sand.u32 %s25, 1
        %s225 = scalar_lea.sflag [#allocation8], %s224
        %s226 = sand.u32 %s59, 1
        %s227 = smul.addr %s226, 64
        %s228 = scalar_lea.vmem [#allocation7], %s227
        // Predicated region
        $region37: #{tpu_custom_call.1} parent=31 // pred_check
          %p229 = pneg %p72
        $region38: #{tpu_custom_call.1} parent=31 // pred_check_branch
          %231 = sbr.rel (%p229) target = $region40
        $region39: #{tpu_custom_call.1} parent=31 // pred_region
          %232 = dma.done %s225, 1024
        $region40: #{tpu_custom_call.1} parent=31 // pred_fallthru
          _
        %s233 = sand.u32 %s25, 1
        %s234 = scalar_lea.sflag [#allocation8], %s233
        %s235 = sand.u32 %s85, 1
        %s236 = smul.addr %s235, 64
        %s237 = scalar_lea.vmem [#allocation9], %s236
        // Predicated region
        $region41: #{tpu_custom_call.1} parent=31 // pred_check
          %p238 = pneg %p98
        $region42: #{tpu_custom_call.1} parent=31 // pred_check_branch
          %240 = sbr.rel (%p238) target = $region44
        $region43: #{tpu_custom_call.1} parent=31 // pred_region
          %241 = dma.done %s234, 1024
        $region44: #{tpu_custom_call.1} parent=31 // pred_fallthru
          _
        %s242 = sand.u32 %s33, 1
        %s243 = scalar_lea.sflag [#allocation5], %s242
        %s244 = sand.u32 %s33, 1
        %s245 = smul.addr %s244, 32
        %s246 = scalar_lea.vmem [#allocation4], %s245
        %p247 = pneg %p46
        %p248 = pneg %p43
        %s249 = sand.u32 %s25, 1
        %s250 = scalar_lea.sflag [#allocation8], %s249
        %s251 = sand.u32 %s59, 1
        %s252 = smul.addr %s251, 64
        %s253 = scalar_lea.vmem [#allocation7], %s252
        %p254 = pneg %p72
        %p255 = pneg %p69
        %s256 = sand.u32 %s25, 1
        %s257 = scalar_lea.sflag [#allocation8], %s256
        %s258 = sand.u32 %s85, 1
        %s259 = smul.addr %s258, 64
        %s260 = scalar_lea.vmem [#allocation9], %s259
        %p261 = pneg %p98
        %p262 = pneg %p95
        %p263 = pneg %p124
        %p264 = pneg %p121
        %s265 = sand.u32 %s111, 1
        %s266 = scalar_lea.sflag [#allocation6], %s265
        %s267 = sand.u32 %s111, 1
        %s268 = smul.addr %s267, 32
        %s269 = scalar_lea.vmem [#allocation10], %s268
        %s270 = smul.u32 4, %s25
        %s271 = smul.u32 4, %s25
        %s272 = smul.u32 4, %s25
        %s273 = smul.u32 4, %s25
        %v275 = vld [vmem:[%s219] sm:$0xff]
        %v276 = vld [vmem:[%s219 + $0x8] sm:$0xff]
        %v277 = vld [vmem:[%s219 + $0x10] sm:$0xff]
        %v278 = vld [vmem:[%s219 + $0x18] sm:$0xff]
        %v279 = vmul.f32 %v275, 0.17677669
        %v280 = vmul.f32 %v276, 0.17677669
        %v281 = vmul.f32 %v277, 0.17677669
        %v282 = vmul.f32 %v278, 0.17677669
        %v283 = vpack.c.bf16 %v279, %v279
        %v284 = vpack.c.bf16 %v280, %v280
        %v285 = vpack.c.bf16 %v281, %v281
        %v286 = vpack.c.bf16 %v282, %v282
        %v287 = vld [vmem:[%s228] sm:$0xff]
        %v288 = vld [vmem:[%s228 + $0x8] sm:$0xff]
        %v289 = vld [vmem:[%s228 + $0x10] sm:$0xff]
        %v290 = vld [vmem:[%s228 + $0x18] sm:$0xff]
        %v291 = vld [vmem:[%s228 + $0x20] sm:$0xff]
        %v292 = vld [vmem:[%s228 + $0x28] sm:$0xff]
        %v293 = vld [vmem:[%s228 + $0x30] sm:$0xff]
        %v294 = vld [vmem:[%s228 + $0x38] sm:$0xff]
        %v295 = vpack.c.bf16 %v288, %v287
        %v296 = vpack.c.bf16 %v290, %v289
        %v297 = vpack.c.bf16 %v292, %v291
        %v298 = vpack.c.bf16 %v294, %v293
        %vm299 = vcmask 261120
        %v301 = vsel %vm299, %v283, 0
        %v304 = vsel %vm299, %v295, 0
        %306 = vmatprep.subr.bf16.mxu0 0
        %307 = vmatpush1.bf16.xpose.msra.mxu0 %v304
        %308 = vmatprep.subr.bf16.mxu0 0
        %309 = vmatpush1.bf16.xpose.msra.mxu0 0
        %310 = vmatprep.subr.bf16.mxu0 0
        %311 = vmatpush1.bf16.xpose.msra.mxu0 0
        %312 = vmatprep.subr.bf16.mxu0 0
        %313 = vmatpush1.bf16.xpose.msra.mxu0 0
        %314 = vmatprep.subr.bf16.mxu0 0
        %315 = vmatpush1.bf16.xpose.msra.mxu0 0
        %316 = vmatprep.subr.bf16.mxu0 0
        %317 = vmatpush1.bf16.xpose.msra.mxu0 0
        %318 = vmatprep.subr.bf16.mxu0 0
        %319 = vmatpush1.bf16.xpose.msra.mxu0 0
        %320 = vmatprep.subr.bf16.mxu0 0
        %321 = vmatpush1.bf16.xpose.msra.mxu0 0
        %322 = vmatprep.subr.bf16.mxu0 0
        %323 = vmatpush1.bf16.xpose.msra.mxu0 0
        %324 = vmatprep.subr.bf16.mxu0 0
        %325 = vmatpush1.bf16.xpose.msra.mxu0 0
        %326 = vmatprep.subr.bf16.mxu0 0
        %327 = vmatpush1.bf16.xpose.msra.mxu0 0
        %328 = vmatprep.subr.bf16.mxu0 0
        %329 = vmatpush1.bf16.xpose.msra.mxu0 0
        %330 = vmatprep.subr.bf16.mxu0 0
        %331 = vmatpush1.bf16.xpose.msra.mxu0 0
        %332 = vmatprep.subr.bf16.mxu0 0
        %333 = vmatpush1.bf16.xpose.msra.mxu0 0
        %334 = vmatprep.subr.bf16.mxu0 0
        %335 = vmatpush1.bf16.xpose.msra.mxu0 0
        %336 = vmatprep.subr.bf16.mxu0 0
        %337 = vmatpush1.bf16.xpose.msra.mxu0 0
        %338 = vmatprep.mubr.bf16.mxu0 0
        %339 = vmatmul.mubr.bf16.gmra.mrb[0].mxu0 %v301
        %v340 = vpop.f32.mrb[0].mxu0
        %v341 = vadd.f32 0.0, %v340
        %v342 = vpop.f32.mrb[0].mxu0
        %v343 = vpop.f32.mrb[0].mxu0
        %v344 = vpop.f32.mrb[0].mxu0
        %345 = vdwg.mxu0
        %v347 = vsel %vm299, %v284, 0
        %v350 = vsel %vm299, %v296, 0
        %352 = vmatprep.subr.bf16.mxu0 0
        %353 = vmatpush1.bf16.xpose.msra.mxu0 %v350
        %354 = vmatprep.subr.bf16.mxu0 0
        %355 = vmatpush1.bf16.xpose.msra.mxu0 0
        %356 = vmatprep.subr.bf16.mxu0 0
        %357 = vmatpush1.bf16.xpose.msra.mxu0 0
        %358 = vmatprep.subr.bf16.mxu0 0
        %359 = vmatpush1.bf16.xpose.msra.mxu0 0
        %360 = vmatprep.subr.bf16.mxu0 0
        %361 = vmatpush1.bf16.xpose.msra.mxu0 0
        %362 = vmatprep.subr.bf16.mxu0 0
        %363 = vmatpush1.bf16.xpose.msra.mxu0 0
        %364 = vmatprep.subr.bf16.mxu0 0
        %365 = vmatpush1.bf16.xpose.msra.mxu0 0
        %366 = vmatprep.subr.bf16.mxu0 0
        %367 = vmatpush1.bf16.xpose.msra.mxu0 0
        %368 = vmatprep.subr.bf16.mxu0 0
        %369 = vmatpush1.bf16.xpose.msra.mxu0 0
        %370 = vmatprep.subr.bf16.mxu0 0
        %371 = vmatpush1.bf16.xpose.msra.mxu0 0
        %372 = vmatprep.subr.bf16.mxu0 0
        %373 = vmatpush1.bf16.xpose.msra.mxu0 0
        %374 = vmatprep.subr.bf16.mxu0 0
        %375 = vmatpush1.bf16.xpose.msra.mxu0 0
        %376 = vmatprep.subr.bf16.mxu0 0
        %377 = vmatpush1.bf16.xpose.msra.mxu0 0
        %378 = vmatprep.subr.bf16.mxu0 0
        %379 = vmatpush1.bf16.xpose.msra.mxu0 0
        %380 = vmatprep.subr.bf16.mxu0 0
        %381 = vmatpush1.bf16.xpose.msra.mxu0 0
        %382 = vmatprep.subr.bf16.mxu0 0
        %383 = vmatpush1.bf16.xpose.msra.mxu0 0
        %384 = vmatprep.mubr.bf16.mxu0 0
        %385 = vmatmul.mubr.bf16.gmra.mrb[0].mxu0 %v347
        %v386 = vpop.f32.mrb[0].mxu0
        %v387 = vadd.f32 0.0, %v386
        %v388 = vpop.f32.mrb[0].mxu0
        %v389 = vpop.f32.mrb[0].mxu0
        %v390 = vpop.f32.mrb[0].mxu0
        %391 = vdwg.mxu0
        %v393 = vsel %vm299, %v285, 0
        %v396 = vsel %vm299, %v297, 0
        %398 = vmatprep.subr.bf16.mxu0 0
        %399 = vmatpush1.bf16.xpose.msra.mxu0 %v396
        %400 = vmatprep.subr.bf16.mxu0 0
        %401 = vmatpush1.bf16.xpose.msra.mxu0 0
        %402 = vmatprep.subr.bf16.mxu0 0
        %403 = vmatpush1.bf16.xpose.msra.mxu0 0
        %404 = vmatprep.subr.bf16.mxu0 0
        %405 = vmatpush1.bf16.xpose.msra.mxu0 0
        %406 = vmatprep.subr.bf16.mxu0 0
        %407 = vmatpush1.bf16.xpose.msra.mxu0 0
        %408 = vmatprep.subr.bf16.mxu0 0
        %409 = vmatpush1.bf16.xpose.msra.mxu0 0
        %410 = vmatprep.subr.bf16.mxu0 0
        %411 = vmatpush1.bf16.xpose.msra.mxu0 0
        %412 = vmatprep.subr.bf16.mxu0 0
        %413 = vmatpush1.bf16.xpose.msra.mxu0 0
        %414 = vmatprep.subr.bf16.mxu0 0
        %415 = vmatpush1.bf16.xpose.msra.mxu0 0
        %416 = vmatprep.subr.bf16.mxu0 0
        %417 = vmatpush1.bf16.xpose.msra.mxu0 0
        %418 = vmatprep.subr.bf16.mxu0 0
        %419 = vmatpush1.bf16.xpose.msra.mxu0 0
        %420 = vmatprep.subr.bf16.mxu0 0
        %421 = vmatpush1.bf16.xpose.msra.mxu0 0
        %422 = vmatprep.subr.bf16.mxu0 0
        %423 = vmatpush1.bf16.xpose.msra.mxu0 0
        %424 = vmatprep.subr.bf16.mxu0 0
        %425 = vmatpush1.bf16.xpose.msra.mxu0 0
        %426 = vmatprep.subr.bf16.mxu0 0
        %427 = vmatpush1.bf16.xpose.msra.mxu0 0
        %428 = vmatprep.subr.bf16.mxu0 0
        %429 = vmatpush1.bf16.xpose.msra.mxu0 0
        %430 = vmatprep.mubr.bf16.mxu0 0
        %431 = vmatmul.mubr.bf16.gmra.mrb[0].mxu0 %v393
        %v432 = vpop.f32.mrb[0].mxu0
        %v433 = vadd.f32 0.0, %v432
        %v434 = vpop.f32.mrb[0].mxu0
        %v435 = vpop.f32.mrb[0].mxu0
        %v436 = vpop.f32.mrb[0].mxu0
        %437 = vdwg.mxu0
        %v439 = vsel %vm299, %v286, 0
        %v442 = vsel %vm299, %v298, 0
        %444 = vmatprep.subr.bf16.mxu0 0
        %445 = vmatpush1.bf16.xpose.msra.mxu0 %v442
        %446 = vmatprep.subr.bf16.mxu0 0
        %447 = vmatpush1.bf16.xpose.msra.mxu0 0
        %448 = vmatprep.subr.bf16.mxu0 0
        %449 = vmatpush1.bf16.xpose.msra.mxu0 0
        %450 = vmatprep.subr.bf16.mxu0 0
        %451 = vmatpush1.bf16.xpose.msra.mxu0 0
        %452 = vmatprep.subr.bf16.mxu0 0
        %453 = vmatpush1.bf16.xpose.msra.mxu0 0
        %454 = vmatprep.subr.bf16.mxu0 0
        %455 = vmatpush1.bf16.xpose.msra.mxu0 0
        %456 = vmatprep.subr.bf16.mxu0 0
        %457 = vmatpush1.bf16.xpose.msra.mxu0 0
        %458 = vmatprep.subr.bf16.mxu0 0
        %459 = vmatpush1.bf16.xpose.msra.mxu0 0
        %460 = vmatprep.subr.bf16.mxu0 0
        %461 = vmatpush1.bf16.xpose.msra.mxu0 0
        %462 = vmatprep.subr.bf16.mxu0 0
        %463 = vmatpush1.bf16.xpose.msra.mxu0 0
        %464 = vmatprep.subr.bf16.mxu0 0
        %465 = vmatpush1.bf16.xpose.msra.mxu0 0
        %466 = vmatprep.subr.bf16.mxu0 0
        %467 = vmatpush1.bf16.xpose.msra.mxu0 0
        %468 = vmatprep.subr.bf16.mxu0 0
        %469 = vmatpush1.bf16.xpose.msra.mxu0 0
        %470 = vmatprep.subr.bf16.mxu0 0
        %471 = vmatpush1.bf16.xpose.msra.mxu0 0
        %472 = vmatprep.subr.bf16.mxu0 0
        %473 = vmatpush1.bf16.xpose.msra.mxu0 0
        %474 = vmatprep.subr.bf16.mxu0 0
        %475 = vmatpush1.bf16.xpose.msra.mxu0 0
        %476 = vmatprep.mubr.bf16.mxu0 0
        %477 = vmatmul.mubr.bf16.gmra.mrb[0].mxu0 %v439
        %v478 = vpop.f32.mrb[0].mxu0
        %v479 = vadd.f32 0.0, %v478
        %v480 = vpop.f32.mrb[0].mxu0
        %v481 = vpop.f32.mrb[0].mxu0
        %v482 = vpop.f32.mrb[0].mxu0
        %483 = vdwg.mxu0
        %vm484 = vcmask 130048
        %v485 = vsel %vm484, %v341, -inf
        %486 = vmax.xlane.f32.xlu0 %v485
        %v487 = vpop.xlane.xlu0 %486
        %v488 = vsel %vm484, %v387, -inf
        %489 = vmax.xlane.f32.xlu0 %v488
        %v490 = vpop.xlane.xlu0 %489
        %v491 = vsel %vm484, %v433, -inf
        %492 = vmax.xlane.f32.xlu0 %v491
        %v493 = vpop.xlane.xlu0 %492
        %v494 = vsel %vm484, %v479, -inf
        %495 = vmax.xlane.f32.xlu0 %v494
        %v496 = vpop.xlane.xlu0 %495
        %v497 = vsub.f32 %v341, %v487
        %v498 = vsub.f32 %v387, %v490
        %v499 = vsub.f32 %v433, %v493
        %v500 = vsub.f32 %v479, %v496
        %v501 = vmul.f32 %v497, 1.442695
        %v502 = vpow.pop %v501
        %v503 = vmul.f32 %v498, 1.442695
        %v504 = vpow.pop %v503
        %v505 = vmul.f32 %v499, 1.442695
        %v506 = vpow.pop %v505
        %v507 = vmul.f32 %v500, 1.442695
        %v508 = vpow.pop %v507
        %v509 = vsel %vm484, %v502, 0.0
        %510 = vadd.xlane.f32.xlu0 %v509
        %v511 = vpop.xlane.xlu0 %510
        %v512 = vsel %vm484, %v504, 0.0
        %513 = vadd.xlane.f32.xlu0 %v512
        %v514 = vpop.xlane.xlu0 %513
        %v515 = vsel %vm484, %v506, 0.0
        %516 = vadd.xlane.f32.xlu0 %v515
        %v517 = vpop.xlane.xlu0 %516
        %v518 = vsel %vm484, %v508, 0.0
        %519 = vadd.xlane.f32.xlu0 %v518
        %v520 = vpop.xlane.xlu0 %519
        %v521 = vrcp.pop %v511
        %v522 = vrcp.pop %v514
        %v523 = vrcp.pop %v517
        %v524 = vrcp.pop %v520
        %v525 = vmul.f32 %v502, %v521
        %v526 = vmul.f32 %v504, %v522
        %v527 = vmul.f32 %v506, %v523
        %v528 = vmul.f32 %v508, %v524
        %v529 = vld [vmem:[%s237] sm:$0xff]
        %v530 = vld [vmem:[%s237 + $0x8] sm:$0xff]
        %v531 = vld [vmem:[%s237 + $0x10] sm:$0xff]
        %v532 = vld [vmem:[%s237 + $0x18] sm:$0xff]
        %v533 = vld [vmem:[%s237 + $0x20] sm:$0xff]
        %v534 = vld [vmem:[%s237 + $0x28] sm:$0xff]
        %v535 = vld [vmem:[%s237 + $0x30] sm:$0xff]
        %v536 = vld [vmem:[%s237 + $0x38] sm:$0xff]
        %v537 = vpack.c.bf16 %v530, %v529
        %v538 = vpack.c.bf16 %v532, %v531
        %v539 = vpack.c.bf16 %v534, %v533
        %v540 = vpack.c.bf16 %v536, %v535
        %v541 = vpack.c.bf16 %v525, %v525
        %v542 = vpack.c.bf16 %v526, %v526
        %v543 = vpack.c.bf16 %v527, %v527
        %v544 = vpack.c.bf16 %v528, %v528
        %v546 = vsel %vm484, %v541, 0
        %548 = vmatprep.subr.bf16.mxu0 0
        %549 = vmatpush1.bf16.msra.mxu0 %v537
        %550 = vmatprep.subr.bf16.mxu0 0
        %551 = vmatpush1.bf16.msra.mxu0 0
        %552 = vmatprep.subr.bf16.mxu0 0
        %553 = vmatpush1.bf16.msra.mxu0 0
        %554 = vmatprep.subr.bf16.mxu0 0
        %555 = vmatpush1.bf16.msra.mxu0 0
        %556 = vmatprep.subr.bf16.mxu0 0
        %557 = vmatpush1.bf16.msra.mxu0 0
        %558 = vmatprep.subr.bf16.mxu0 0
        %559 = vmatpush1.bf16.msra.mxu0 0
        %560 = vmatprep.subr.bf16.mxu0 0
        %561 = vmatpush1.bf16.msra.mxu0 0
        %562 = vmatprep.subr.bf16.mxu0 0
        %563 = vmatpush1.bf16.msra.mxu0 0
        %564 = vmatprep.subr.bf16.mxu0 0
        %565 = vmatpush1.bf16.msra.mxu0 0
        %566 = vmatprep.subr.bf16.mxu0 0
        %567 = vmatpush1.bf16.msra.mxu0 0
        %568 = vmatprep.subr.bf16.mxu0 0
        %569 = vmatpush1.bf16.msra.mxu0 0
        %570 = vmatprep.subr.bf16.mxu0 0
        %571 = vmatpush1.bf16.msra.mxu0 0
        %572 = vmatprep.subr.bf16.mxu0 0
        %573 = vmatpush1.bf16.msra.mxu0 0
        %574 = vmatprep.subr.bf16.mxu0 0
        %575 = vmatpush1.bf16.msra.mxu0 0
        %576 = vmatprep.subr.bf16.mxu0 0
        %577 = vmatpush1.bf16.msra.mxu0 0
        %578 = vmatprep.subr.bf16.mxu0 0
        %579 = vmatpush1.bf16.msra.mxu0 0
        %580 = vmatprep.mubr.bf16.mxu0 0
        %581 = vmatmul.mubr.bf16.gmra.mrb[0].mxu0 %v546
        %v582 = vpop.f32.mrb[0].mxu0
        %v583 = vadd.f32 0.0, %v582
        %v584 = vpop.f32.mrb[0].mxu0
        %v585 = vpop.f32.mrb[0].mxu0
        %v586 = vpop.f32.mrb[0].mxu0
        %587 = vdwg.mxu0
        %v589 = vsel %vm484, %v542, 0
        %591 = vmatprep.subr.bf16.mxu0 0
        %592 = vmatpush1.bf16.msra.mxu0 %v538
        %593 = vmatprep.subr.bf16.mxu0 0
        %594 = vmatpush1.bf16.msra.mxu0 0
        %595 = vmatprep.subr.bf16.mxu0 0
        %596 = vmatpush1.bf16.msra.mxu0 0
        %597 = vmatprep.subr.bf16.mxu0 0
        %598 = vmatpush1.bf16.msra.mxu0 0
        %599 = vmatprep.subr.bf16.mxu0 0
        %600 = vmatpush1.bf16.msra.mxu0 0
        %601 = vmatprep.subr.bf16.mxu0 0
        %602 = vmatpush1.bf16.msra.mxu0 0
        %603 = vmatprep.subr.bf16.mxu0 0
        %604 = vmatpush1.bf16.msra.mxu0 0
        %605 = vmatprep.subr.bf16.mxu0 0
        %606 = vmatpush1.bf16.msra.mxu0 0
        %607 = vmatprep.subr.bf16.mxu0 0
        %608 = vmatpush1.bf16.msra.mxu0 0
        %609 = vmatprep.subr.bf16.mxu0 0
        %610 = vmatpush1.bf16.msra.mxu0 0
        %611 = vmatprep.subr.bf16.mxu0 0
        %612 = vmatpush1.bf16.msra.mxu0 0
        %613 = vmatprep.subr.bf16.mxu0 0
        %614 = vmatpush1.bf16.msra.mxu0 0
        %615 = vmatprep.subr.bf16.mxu0 0
        %616 = vmatpush1.bf16.msra.mxu0 0
        %617 = vmatprep.subr.bf16.mxu0 0
        %618 = vmatpush1.bf16.msra.mxu0 0
        %619 = vmatprep.subr.bf16.mxu0 0
        %620 = vmatpush1.bf16.msra.mxu0 0
        %621 = vmatprep.subr.bf16.mxu0 0
        %622 = vmatpush1.bf16.msra.mxu0 0
        %623 = vmatprep.mubr.bf16.mxu0 0
        %624 = vmatmul.mubr.bf16.gmra.mrb[0].mxu0 %v589
        %v625 = vpop.f32.mrb[0].mxu0
        %v626 = vadd.f32 0.0, %v625
        %v627 = vpop.f32.mrb[0].mxu0
        %v628 = vpop.f32.mrb[0].mxu0
        %v629 = vpop.f32.mrb[0].mxu0
        %630 = vdwg.mxu0
        %v632 = vsel %vm484, %v543, 0
        %634 = vmatprep.subr.bf16.mxu0 0
        %635 = vmatpush1.bf16.msra.mxu0 %v539
        %636 = vmatprep.subr.bf16.mxu0 0
        %637 = vmatpush1.bf16.msra.mxu0 0
        %638 = vmatprep.subr.bf16.mxu0 0
        %639 = vmatpush1.bf16.msra.mxu0 0
        %640 = vmatprep.subr.bf16.mxu0 0
        %641 = vmatpush1.bf16.msra.mxu0 0
        %642 = vmatprep.subr.bf16.mxu0 0
        %643 = vmatpush1.bf16.msra.mxu0 0
        %644 = vmatprep.subr.bf16.mxu0 0
        %645 = vmatpush1.bf16.msra.mxu0 0
        %646 = vmatprep.subr.bf16.mxu0 0
        %647 = vmatpush1.bf16.msra.mxu0 0
        %648 = vmatprep.subr.bf16.mxu0 0
        %649 = vmatpush1.bf16.msra.mxu0 0
        %650 = vmatprep.subr.bf16.mxu0 0
        %651 = vmatpush1.bf16.msra.mxu0 0
        %652 = vmatprep.subr.bf16.mxu0 0
        %653 = vmatpush1.bf16.msra.mxu0 0
        %654 = vmatprep.subr.bf16.mxu0 0
        %655 = vmatpush1.bf16.msra.mxu0 0
        %656 = vmatprep.subr.bf16.mxu0 0
        %657 = vmatpush1.bf16.msra.mxu0 0
        %658 = vmatprep.subr.bf16.mxu0 0
        %659 = vmatpush1.bf16.msra.mxu0 0
        %660 = vmatprep.subr.bf16.mxu0 0
        %661 = vmatpush1.bf16.msra.mxu0 0
        %662 = vmatprep.subr.bf16.mxu0 0
        %663 = vmatpush1.bf16.msra.mxu0 0
        %664 = vmatprep.subr.bf16.mxu0 0
        %665 = vmatpush1.bf16.msra.mxu0 0
        %666 = vmatprep.mubr.bf16.mxu0 0
        %667 = vmatmul.mubr.bf16.gmra.mrb[0].mxu0 %v632
        %v668 = vpop.f32.mrb[0].mxu0
        %v669 = vadd.f32 0.0, %v668
        %v670 = vpop.f32.mrb[0].mxu0
        %v671 = vpop.f32.mrb[0].mxu0
        %v672 = vpop.f32.mrb[0].mxu0
        %673 = vdwg.mxu0
        %v675 = vsel %vm484, %v544, 0
        %677 = vmatprep.subr.bf16.mxu0 0
        %678 = vmatpush1.bf16.msra.mxu0 %v540
        %679 = vmatprep.subr.bf16.mxu0 0
        %680 = vmatpush1.bf16.msra.mxu0 0
        %681 = vmatprep.subr.bf16.mxu0 0
        %682 = vmatpush1.bf16.msra.mxu0 0
        %683 = vmatprep.subr.bf16.mxu0 0
        %684 = vmatpush1.bf16.msra.mxu0 0
        %685 = vmatprep.subr.bf16.mxu0 0
        %686 = vmatpush1.bf16.msra.mxu0 0
        %687 = vmatprep.subr.bf16.mxu0 0
        %688 = vmatpush1.bf16.msra.mxu0 0
        %689 = vmatprep.subr.bf16.mxu0 0
        %690 = vmatpush1.bf16.msra.mxu0 0
        %691 = vmatprep.subr.bf16.mxu0 0
        %692 = vmatpush1.bf16.msra.mxu0 0
        %693 = vmatprep.subr.bf16.mxu0 0
        %694 = vmatpush1.bf16.msra.mxu0 0
        %695 = vmatprep.subr.bf16.mxu0 0
        %696 = vmatpush1.bf16.msra.mxu0 0
        %697 = vmatprep.subr.bf16.mxu0 0
        %698 = vmatpush1.bf16.msra.mxu0 0
        %699 = vmatprep.subr.bf16.mxu0 0
        %700 = vmatpush1.bf16.msra.mxu0 0
        %701 = vmatprep.subr.bf16.mxu0 0
        %702 = vmatpush1.bf16.msra.mxu0 0
        %703 = vmatprep.subr.bf16.mxu0 0
        %704 = vmatpush1.bf16.msra.mxu0 0
        %705 = vmatprep.subr.bf16.mxu0 0
        %706 = vmatpush1.bf16.msra.mxu0 0
        %707 = vmatprep.subr.bf16.mxu0 0
        %708 = vmatpush1.bf16.msra.mxu0 0
        %709 = vmatprep.mubr.bf16.mxu0 0
        %710 = vmatmul.mubr.bf16.gmra.mrb[0].mxu0 %v675
        %v711 = vpop.f32.mrb[0].mxu0
        %v712 = vadd.f32 0.0, %v711
        %v713 = vpop.f32.mrb[0].mxu0
        %v714 = vpop.f32.mrb[0].mxu0
        %v715 = vpop.f32.mrb[0].mxu0
        %716 = vdwg.mxu0
        %717 = vst.msk [vmem:[%s269] sm:$0xff] %vm299, %v583
        %718 = vst.msk [vmem:[%s269 + $0x8] sm:$0xff] %vm299, %v626
        %719 = vst.msk [vmem:[%s269 + $0x10] sm:$0xff] %vm299, %v669
        %720 = vst.msk [vmem:[%s269 + $0x18] sm:$0xff] %vm299, %v712
        %s721 = sand.u32 %s111, 1
        %s722 = scalar_lea.sflag [#allocation6], %s721
        %s723 = sand.u32 %s111, 1
        %s724 = smul.addr %s723, 32
        %s725 = scalar_lea.vmem [#allocation10], %s724
        // Predicated region
        $region45: #{tpu_custom_call.1} parent=31 // pred_check
          %p726 = pneg %p121
        $region46: #{tpu_custom_call.1} parent=31 // pred_check_branch
          %728 = sbr.rel (%p726) target = $region48
        $region47: #{tpu_custom_call.1} parent=31 // pred_region
          %s729 = smul.u32 4, %s25
          %s731 = ssub.s32 512, 512
          %732 = vsyncadd %s722, %s731
          %s733 = smul.addr %s729, 128
          %s734 = scalar_lea.hbm %s4, %s733
          %s735 = sshll.u32 %s725, 4
          %s736 = int_to_ptr.vmem [resolvable:$true] %s735
          %741 = dma.vmem_to_hbm [thread:$0]  %s736, 512, %s734, %s722, 128, 128, 8
        $region48: #{tpu_custom_call.1} parent=31 // pred_fallthru
          _
      $region32: #{tpu_custom_call.1} parent=5 // pred_fallthru
        _
      %p742 = scmp.le.s32.totalorder 2, %s20
      // Predicated region
      $region49: #{tpu_custom_call.1} parent=5 // pred_check
        %p743 = pneg %p742
      $region50: #{tpu_custom_call.1} parent=5 // pred_check_branch
        %745 = sbr.rel (%p743) target = $region52
      $region51: #{tpu_custom_call.1} parent=5 // pred_region
        %s746 = ssub.s32 %s20, 2
        // Predicated region
        $region53: #{tpu_custom_call.1} parent=51 // pred_check
          %p747 = pneg %p127
        $region54: #{tpu_custom_call.1} parent=51 // pred_check_branch
          %749 = sbr.rel (%p747) target = $region56
        $region55: #{tpu_custom_call.1} parent=51 // pred_region
          %s750 = sand.u32 %s112, 1
          %s751 = scalar_lea.sflag [#allocation6], %s750
          %s752 = sand.u32 %s112, 1
          %s753 = smul.addr %s752, 32
          %s754 = scalar_lea.vmem [#allocation10], %s753
          %755 = dma.done %s751, 512
        $region56: #{tpu_custom_call.1} parent=51 // pred_fallthru
          _
      $region52: #{tpu_custom_call.1} parent=5 // pred_fallthru
        _
    $region6: #{tpu_custom_call.1} parent=1 // loop_footer
      %s24 = sadd.s32 1, %s20
    $region7: #{tpu_custom_call.1} parent=1 // loop_footer_branch
      %19 = sbr.rel target = $region3
    $region8: #{tpu_custom_call.1} parent=1 // loop_exit
      _
    %756 = vsyncpa [#allocation5], 1
    %s757 = scalar_lea.sflag [#allocation5], 1
    %758 = vsyncpa %s757, 1
    %759 = vsyncpa [#allocation8], 1
    %s760 = scalar_lea.sflag [#allocation8], 1
    %761 = vsyncpa %s760, 1
    %762 = vsyncpa [#allocation6], 1
    %s763 = scalar_lea.sflag [#allocation6], 1
    %764 = vsyncpa %s763, 1

</llo_original>
